<compile_context>
chip_gen: v7x
topology: tpu7x:2x2x1
jax: 0.10.0
libtpu: 0.0.40
codegen_flags: <defaults>
</compile_context>

<pallas_src>
import functools

import jax
import jax.numpy as jnp
from jax.experimental import pallas as pl
from jax.experimental.pallas import tpu as pltpu

LANE = 128     # lane width
SUB = 8        # sublane height of one f32 vreg
MAX_TM = 8192  # rows per grid step: 2 inputs x 2 bufs x 8192x128x4B = 16 MiB
CHUNK = 1024   # rows per in-kernel sub-chunk (bounds elementwise temporaries)


def _dice_focal_kernel(logits_ref, targets_ref, out_ref, *,
                       alpha, gamma, tm, chunk, nblocks, spc,
                       need_guard, assume_binary):
    s = pl.program_id(1)

    @pl.when(s == 0)
    def _():
        out_ref[...] = jnp.zeros_like(out_ref)

    n_chunks = tm // chunk

    # Ones matrix for the MXU-based column-sum fold:
    #   (8, chunk) @ (chunk, 128) -> (8, 128) with the column sum replicated
    # across all 8 sublanes (the wrapper divides by SUB).  This moves the
    # reduction adds from the near-binding VALU slot onto the idle MXU.
    ones = jnp.ones((SUB, chunk), jnp.float32)

    def fold(v):
        return jnp.dot(ones, v, preferred_element_type=jnp.float32)

    def accumulate():
        @pl.loop(0, n_chunks)
        def _(i):
            r0 = pl.multiple_of(i * chunk, chunk)
            x = logits_ref[pl.ds(r0, chunk), :].astype(jnp.float32)
            t = targets_ref[pl.ds(r0, chunk), :].astype(jnp.float32)

            # Shared transcendental: e = exp(-|x|) feeds both the sigmoid and
            # the numerically-stable BCE log1p term.
            e = jnp.exp(-jnp.abs(x))
            inv_1pe = pl.reciprocal(1.0 + e, approx=True)     # EUP, not VALU
            p = jnp.where(x >= 0, inv_1pe, e * inv_1pe)        # sigmoid(x)

            # BCE-with-logits (PyTorch stable form):
            #   max(x, 0) - x*t + log1p(exp(-|x|))
            bce = jnp.maximum(x, 0.0) - x * t + jnp.log1p(e)

            # Focal modulating factor: (1 - exp(-bce))**gamma
            if assume_binary:
                # exp(-bce) == t*p + (1-t)*(1-p) exactly for t in {0, 1}.
                emb = t * p + (1.0 - t) * (1.0 - p)
            else:
                emb = jnp.exp(-bce)
            u = 1.0 - emb
            g = float(gamma)
            if g == int(g) and 0 <= int(g) <= 8:
                gi = int(g)
                mod = jnp.ones_like(u) if gi == 0 else u
                for _ in range(gi - 1):                         # gamma=2 -> 1 mul
                    mod = mod * u
            else:
                mod = jnp.power(jnp.maximum(u, 0.0), g)         # clamp avoids NaN
            focal = alpha * mod * bce

            out_ref[0, 0] += fold(p * t)    # sum(probs * targets)
            out_ref[0, 1] += fold(p + t)    # sum(probs) + sum(targets) (merged)
            out_ref[0, 2] += fold(focal)    # sum(focal)

    if need_guard:
        c = pl.program_id(0)

        @pl.when(c * spc + s < nblocks)
        def _():
            accumulate()
    else:
        accumulate()


def _round_up(x, m):
    return ((x + m - 1) // m) * m


def _num_megacores():
    """2 for chips exposing two TensorCores behind one device, else 1."""
    try:
        kind = jax.devices()[0].device_kind.lower()
    except Exception:
        return 1
    return 2 if any(k in kind for k in ("v4", "v5p", "v7")) else 1


def dice_focal_loss(logits, targets, alpha=0.25, gamma=2, smooth=1e-6,
                    assume_binary_targets=False):
    """Pallas implementation of DiceFocalLoss.forward (returns a scalar).

    Set ``assume_binary_targets=True`` when targets are hard 0/1 masks to
    skip one exp per element (mathematically identical for binary targets).
    """
    n = int(logits.size)
    flat_l = jnp.ravel(logits).astype(jnp.float32)
    flat_t = jnp.ravel(targets).astype(jnp.float32)

    rows_needed = pl.cdiv(n, LANE)
    if rows_needed <= CHUNK:
        tm = max(SUB, _round_up(rows_needed, SUB))
        chunk = tm
    else:
        tm = min(MAX_TM, _round_up(rows_needed, CHUNK))
        chunk = CHUNK
    nblocks = pl.cdiv(rows_needed, tm)
    rows = nblocks * tm
    padded = rows * LANE

    if padded != n:
        # Pad with self-cancelling constants: sigmoid(-1e9)=0, bce=0, focal=0,
        # target=0 -> padded elements add exactly zero to every sum, so the
        # kernel needs NO per-element masking.
        flat_l = jnp.pad(flat_l, (0, padded - n), constant_values=-1e9)
        flat_t = jnp.pad(flat_t, (0, padded - n), constant_values=0.0)

    l2 = flat_l.reshape(rows, LANE)
    t2 = flat_t.reshape(rows, LANE)

    ncores = _num_megacores()
    spc = pl.cdiv(nblocks, ncores)             # grid steps per core
    need_guard = ncores * spc != nblocks       # only uneven core splits guard

    kernel = functools.partial(
        _dice_focal_kernel,
        alpha=float(alpha), gamma=float(gamma),
        tm=tm, chunk=chunk, nblocks=nblocks, spc=spc,
        need_guard=need_guard, assume_binary=bool(assume_binary_targets))

    def in_map(c, s):
        # Clamp so the DMA block index always stays in range; the (rare)
        # duplicate block is skipped by the scalar guard inside the kernel.
        return (jnp.minimum(c * spc + s, nblocks - 1), 0)

    # Double-buffered inputs + generous headroom for temporaries / scratch.
    vmem_limit = int(2 * 2 * tm * LANE * 4 + (16 << 20))

    partial_sums = pl.pallas_call(
        kernel,
        out_shape=jax.ShapeDtypeStruct((ncores, 3, SUB, LANE), jnp.float32),
        grid_spec=pltpu.PrefetchScalarGridSpec(
            num_scalar_prefetch=0,
            grid=(ncores, spc),
            in_specs=[
                pl.BlockSpec((tm, LANE), in_map),
                pl.BlockSpec((tm, LANE), in_map),
            ],
            out_specs=pl.BlockSpec((1, 3, SUB, LANE),
                                   lambda c, s: (c, 0, 0, 0)),
        ),
        compiler_params=pltpu.CompilerParams(
            dimension_semantics=("parallel", "arbitrary"),
            vmem_limit_bytes=vmem_limit),
        cost_estimate=pl.CostEstimate(
            flops=60 * padded,
            transcendentals=3 * padded,
            bytes_accessed=2 * padded * 4 + ncores * 3 * SUB * LANE * 4),
    )(l2, t2)

    # Tiny epilogue in plain JAX: cross-core / cross-lane reduction (divide by
    # SUB to undo the MXU fold's sublane replication) + scalar combination.
    sums = jnp.sum(partial_sums, axis=(0, 2, 3)) / SUB     # (3,)
    s_pt, s_psum, s_f = sums[0], sums[1], sums[2]
    dice_l = 1.0 - (2.0 * s_pt + smooth) / (s_psum + smooth)
    focal_mean = s_f / n
    return dice_l + focal_mean


def _reference(logits, targets, alpha=0.25, gamma=2, smooth=1e-6):
    # Pure-JAX reference matching the PyTorch module.
    probs = jax.nn.sigmoid(logits)
    pf = probs.reshape(-1)
    tf = targets.reshape(-1)
    inter = jnp.sum(pf * tf)
    dice = 1.0 - (2.0 * inter + smooth) / (jnp.sum(pf) + jnp.sum(tf) + smooth)
    bce = (jnp.maximum(logits, 0.0) - logits * targets
           + jnp.log1p(jnp.exp(-jnp.abs(logits))))
    focal = alpha * (1.0 - jnp.exp(-bce)) ** gamma * bce
    return dice + jnp.mean(focal)


if __name__ == "__main__":
    key = jax.random.PRNGKey(0)
    k1, k2 = jax.random.split(key)

    # Small shapes consistent with a segmentation loss: (B, C, H, W)
    logits = jax.random.normal(k1, (2, 4, 16, 16), dtype=jnp.float32)
    targets = (jax.random.uniform(k2, (2, 4, 16, 16)) > 0.5).astype(jnp.float32)

    ref = _reference(logits, targets)

    # Default path (exact for soft targets too).
    loss = dice_focal_loss(logits, targets)
    jax.block_until_ready(loss)
    assert jnp.allclose(loss, ref, rtol=1e-3, atol=1e-3), (loss, ref)

    # Binary-target fast path (one fewer transcendental per element).
    loss_bin = dice_focal_loss(logits, targets, assume_binary_targets=True)
    jax.block_until_ready(loss_bin)
    assert jnp.allclose(loss_bin, ref, rtol=1e-3, atol=1e-3), (loss_bin, ref)

    print("KERNEL_OK")
</pallas_src>

<mosaic_0001>
module attributes {stable_mosaic.version = 11 : i64} {
  func.func @_dice_focal_kernel(%arg0: i32, %arg1: i32, %arg2: memref<16x128xf32, #tpu.memory_space<vmem>>, %arg3: memref<16x128xf32, #tpu.memory_space<vmem>>, %arg4: memref<1x3x8x128xf32, #tpu.memory_space<vmem>>) attributes {dimension_semantics = [#tpu.dimension_semantics<parallel>, #tpu.dimension_semantics<arbitrary>], iteration_bounds = array<i64: 1, 1>, scalar_prefetch = 0 : i64, scratch_operands = 0 : i64, tpu.core_type = #tpu.core_type<tc>, window_params = [{transform_indices = @transform_0, window_bounds = array<i64: 16, 128>}, {transform_indices = @transform_1, window_bounds = array<i64: 16, 128>}, {transform_indices = @transform_2, window_bounds = array<i64: 1, 3, 8, 128>}]} {
    %c0_i32 = arith.constant 0 : i32
    %0 = arith.cmpi eq, %arg1, %c0_i32 : i32
    %1 = arith.extui %0 : i1 to i32
    %c0_i32_0 = arith.constant 0 : i32
    %2 = arith.cmpi ne, %1, %c0_i32_0 : i32
    scf.if %2 {
      %cst_37 = arith.constant 0.000000e+00 : f32
      %61 = vector.broadcast %cst_37 : f32 to vector<1x3x8x128xf32>
      %c0_38 = arith.constant 0 : index
      %c0_39 = arith.constant 0 : index
      %c0_40 = arith.constant 0 : index
      %c0_41 = arith.constant 0 : index
      %62 = vector.load %arg4[%c0_38, %c0_39, %c0_40, %c0_41] : memref<1x3x8x128xf32, #tpu.memory_space<vmem>>, vector<1x3x8x128xf32>
      tpu.vector_store %arg4[%c0_38, %c0_39, %c0_40, %c0_41], %61 {strides = array<i32>} : memref<1x3x8x128xf32, #tpu.memory_space<vmem>>, vector<1x3x8x128xf32>,
    } else {
    }
    %cst = arith.constant 1.000000e+00 : f32
    %3 = vector.broadcast %cst : f32 to vector<8x16xf32>
    %c0_i32_1 = arith.constant 0 : i32
    %c1_i32 = arith.constant 1 : i32
    %4 = arith.muli %c0_i32_1, %c1_i32 : i32
    %c0_i32_2 = arith.constant 0 : i32
    %5 = arith.addi %c0_i32_2, %4 : i32
    %c16_i32 = arith.constant 16 : i32
    %6 = arith.muli %5, %c16_i32 : i32
    %7 = tpu.assume_multiple %6, 16 : i32
    %8 = arith.index_cast %7 : i32 to index
    %c0 = arith.constant 0 : index
    %9 = vector.load %arg2[%8, %c0] : memref<16x128xf32, #tpu.memory_space<vmem>>, vector<16x128xf32>
    %10 = arith.index_cast %7 : i32 to index
    %c0_3 = arith.constant 0 : index
    %11 = vector.load %arg3[%10, %c0_3] : memref<16x128xf32, #tpu.memory_space<vmem>>, vector<16x128xf32>
    %12 = math.absf %9 : vector<16x128xf32>
    %cst_4 = arith.constant 0.000000e+00 : f32
    %13 = vector.broadcast %cst_4 : f32 to vector<16x128xf32>
    %14 = arith.subf %13, %12 : vector<16x128xf32>
    %15 = math.exp %14 : vector<16x128xf32>
    %cst_5 = arith.constant 1.000000e+00 : f32
    %16 = vector.broadcast %cst_5 : f32 to vector<16x128xf32>
    %17 = arith.addf %16, %15 : vector<16x128xf32>
    %18 = tpu.reciprocal %17 {approx = true} : vector<16x128xf32> -> vector<16x128xf32>
    %cst_6 = arith.constant 0.000000e+00 : f32
    %19 = vector.broadcast %cst_6 : f32 to vector<16x128xf32>
    %20 = arith.cmpf oge, %9, %19 : vector<16x128xf32>
    %21 = arith.mulf %15, %18 : vector<16x128xf32>
    %22 = arith.select %20, %18, %21 : vector<16x128xi1>, vector<16x128xf32>
    %cst_7 = arith.constant 0.000000e+00 : f32
    %23 = vector.broadcast %cst_7 : f32 to vector<16x128xf32>
    %24 = arith.maximumf %9, %23 : vector<16x128xf32>
    %25 = arith.mulf %9, %11 : vector<16x128xf32>
    %26 = arith.subf %24, %25 : vector<16x128xf32>
    %27 = math.log1p %15 : vector<16x128xf32>
    %28 = arith.addf %26, %27 : vector<16x128xf32>
    %cst_8 = arith.constant 0.000000e+00 : f32
    %29 = vector.broadcast %cst_8 : f32 to vector<16x128xf32>
    %30 = arith.subf %29, %28 : vector<16x128xf32>
    %31 = math.exp %30 : vector<16x128xf32>
    %cst_9 = arith.constant 1.000000e+00 : f32
    %32 = vector.broadcast %cst_9 : f32 to vector<16x128xf32>
    %33 = arith.subf %32, %31 : vector<16x128xf32>
    %34 = arith.mulf %33, %33 : vector<16x128xf32>
    %cst_10 = arith.constant 2.500000e-01 : f32
    %35 = vector.broadcast %cst_10 : f32 to vector<16x128xf32>
    %36 = arith.mulf %35, %34 : vector<16x128xf32>
    %37 = arith.mulf %36, %28 : vector<16x128xf32>
    %c0_11 = arith.constant 0 : index
    %c0_12 = arith.constant 0 : index
    %c0_13 = arith.constant 0 : index
    %c0_14 = arith.constant 0 : index
    %38 = vector.load %arg4[%c0_11, %c0_12, %c0_13, %c0_14] : memref<1x3x8x128xf32, #tpu.memory_space<vmem>>, vector<1x1x8x128xf32>
    %39 = vector.shape_cast %38 : vector<1x1x8x128xf32> to vector<8x128xf32>
    %40 = arith.mulf %22, %11 : vector<16x128xf32>
    %cst_15 = arith.constant dense<0.000000e+00> : vector<8x128xf32>
    %41 = tpu.matmul %3, %40, %cst_15 {dimension_numbers = #tpu.dot_dimension_numbers<[1], [0], [0], [1], [0, 0, 1, 1], [], []>} : vector<8x16xf32>, vector<16x128xf32>, vector<8x128xf32> -> vector<8x128xf32>
    %42 = arith.addf %39, %41 : vector<8x128xf32>
    %c0_16 = arith.constant 0 : index
    %c0_17 = arith.constant 0 : index
    %c0_18 = arith.constant 0 : index
    %c0_19 = arith.constant 0 : index
    %43 = vector.load %arg4[%c0_16, %c0_17, %c0_18, %c0_19] : memref<1x3x8x128xf32, #tpu.memory_space<vmem>>, vector<1x1x8x128xf32>
    %44 = vector.shape_cast %43 : vector<1x1x8x128xf32> to vector<8x128xf32>
    %45 = vector.shape_cast %42 : vector<8x128xf32> to vector<1x1x8x128xf32>
    tpu.vector_store %arg4[%c0_16, %c0_17, %c0_18, %c0_19], %45 {strides = array<i32>} : memref<1x3x8x128xf32, #tpu.memory_space<vmem>>, vector<1x1x8x128xf32>,
    %c0_20 = arith.constant 0 : index
    %c1 = arith.constant 1 : index
    %c0_21 = arith.constant 0 : index
    %c0_22 = arith.constant 0 : index
    %46 = vector.load %arg4[%c0_20, %c1, %c0_21, %c0_22] : memref<1x3x8x128xf32, #tpu.memory_space<vmem>>, vector<1x1x8x128xf32>
    %47 = vector.shape_cast %46 : vector<1x1x8x128xf32> to vector<8x128xf32>
    %48 = arith.addf %22, %11 : vector<16x128xf32>
    %cst_23 = arith.constant dense<0.000000e+00> : vector<8x128xf32>
    %49 = tpu.matmul %3, %48, %cst_23 {dimension_numbers = #tpu.dot_dimension_numbers<[1], [0], [0], [1], [0, 0, 1, 1], [], []>} : vector<8x16xf32>, vector<16x128xf32>, vector<8x128xf32> -> vector<8x128xf32>
    %50 = arith.addf %47, %49 : vector<8x128xf32>
    %c0_24 = arith.constant 0 : index
    %c1_25 = arith.constant 1 : index
    %c0_26 = arith.constant 0 : index
    %c0_27 = arith.constant 0 : index
    %51 = vector.load %arg4[%c0_24, %c1_25, %c0_26, %c0_27] : memref<1x3x8x128xf32, #tpu.memory_space<vmem>>, vector<1x1x8x128xf32>
    %52 = vector.shape_cast %51 : vector<1x1x8x128xf32> to vector<8x128xf32>
    %53 = vector.shape_cast %50 : vector<8x128xf32> to vector<1x1x8x128xf32>
    tpu.vector_store %arg4[%c0_24, %c1_25, %c0_26, %c0_27], %53 {strides = array<i32>} : memref<1x3x8x128xf32, #tpu.memory_space<vmem>>, vector<1x1x8x128xf32>,
    %c0_28 = arith.constant 0 : index
    %c2 = arith.constant 2 : index
    %c0_29 = arith.constant 0 : index
    %c0_30 = arith.constant 0 : index
    %54 = vector.load %arg4[%c0_28, %c2, %c0_29, %c0_30] : memref<1x3x8x128xf32, #tpu.memory_space<vmem>>, vector<1x1x8x128xf32>
    %55 = vector.shape_cast %54 : vector<1x1x8x128xf32> to vector<8x128xf32>
    %cst_31 = arith.constant dense<0.000000e+00> : vector<8x128xf32>
    %56 = tpu.matmul %3, %37, %cst_31 {dimension_numbers = #tpu.dot_dimension_numbers<[1], [0], [0], [1], [0, 0, 1, 1], [], []>} : vector<8x16xf32>, vector<16x128xf32>, vector<8x128xf32> -> vector<8x128xf32>
    %57 = arith.addf %55, %56 : vector<8x128xf32>
    %c0_32 = arith.constant 0 : index
    %c2_33 = arith.constant 2 : index
    %c0_34 = arith.constant 0 : index
    %c0_35 = arith.constant 0 : index
    %58 = vector.load %arg4[%c0_32, %c2_33, %c0_34, %c0_35] : memref<1x3x8x128xf32, #tpu.memory_space<vmem>>, vector<1x1x8x128xf32>
    %59 = vector.shape_cast %58 : vector<1x1x8x128xf32> to vector<8x128xf32>
    %60 = vector.shape_cast %57 : vector<8x128xf32> to vector<1x1x8x128xf32>
    tpu.vector_store %arg4[%c0_32, %c2_33, %c0_34, %c0_35], %60 {strides = array<i32>} : memref<1x3x8x128xf32, #tpu.memory_space<vmem>>, vector<1x1x8x128xf32>,
    %c1_i32_36 = arith.constant 1 : i32
    return
  }
  func.func @transform_0(%arg0: i32, %arg1: i32) -> (i32, i32) {
    %c1_i32 = arith.constant 1 : i32
    %0 = arith.muli %arg0, %c1_i32 : i32
    %1 = arith.addi %0, %arg1 : i32
    %c0_i32 = arith.constant 0 : i32
    %2 = arith.minsi %1, %c0_i32 : i32
    %c0_i32_0 = arith.constant 0 : i32
    %c0_i32_1 = arith.constant 0 : i32
    return %2, %c0_i32_0 : i32, i32
  }
  func.func @transform_1(%arg0: i32, %arg1: i32) -> (i32, i32) {
    %c1_i32 = arith.constant 1 : i32
    %0 = arith.muli %arg0, %c1_i32 : i32
    %1 = arith.addi %0, %arg1 : i32
    %c0_i32 = arith.constant 0 : i32
    %2 = arith.minsi %1, %c0_i32 : i32
    %c0_i32_0 = arith.constant 0 : i32
    %c0_i32_1 = arith.constant 0 : i32
    return %2, %c0_i32_0 : i32, i32
  }
  func.func @transform_2(%arg0: i32, %arg1: i32) -> (i32, i32, i32, i32) {
    %c0_i32 = arith.constant 0 : i32
    %c0_i32_0 = arith.constant 0 : i32
    %c0_i32_1 = arith.constant 0 : i32
    %c0_i32_2 = arith.constant 0 : i32
    return %arg0, %c0_i32, %c0_i32_0, %c0_i32_1 : i32, i32, i32, i32
  }
}

</mosaic_0001>

<llo_original>
// kernel: tpu_custom_call.1
$region0: #{tpu_custom_call.1}
  #allocation0 [shape = 'u32[]', space=smem, size = 0x4, offset = 0x4, fixed_abs, tag = 'smem constant byte address 0x4 - core index']
  #allocation1 [shape = 'u32[144,128]{1,0:T(1,128)}', space=vmem, size = 0x12000, scoped, tag = 'internal scratch']
  %s0 = inlined_call_operand.hbm [shape: f32[16,128], index: 0, kind: input, shape index: {}]
  %s1 = inlined_call_operand.hbm [shape: f32[16,128], index: 1, kind: input, shape index: {}]
  %s2 = inlined_call_operand.hbm [shape: f32[1,3,8,128], index: 2, kind: output, shape index: {}]
  %s3 = sld [smem:[#allocation0]]
  $region30: #{tpu_custom_call.1} parent=0
    _
  %s5 = ssub.s32 1, %s3
  %s6 = scalar_select 0, %s5, %s3
  $region1: #{tpu_custom_call.1} parent=0
    #allocation2 [shape = 'u8[8192]{0}', space=vmem, size = 0x2000, scoped, tag = 'input window, operand 0, single buffered']
    #allocation3 [shape = 's32[1]{0}', space=sflag, size = 0x4, scoped, tag = 'scoped memory for tpu_custom_call.1']
    #allocation4 [shape = 's32[1]{0}', space=sflag, size = 0x4, scoped, tag = 'scoped memory for tpu_custom_call.1']
    #allocation5 [shape = 'u8[8192]{0}', space=vmem, size = 0x2000, scoped, tag = 'input window, operand 1, single buffered']
    #allocation6 [shape = 's32[1]{0}', space=sflag, size = 0x4, scoped, tag = 'scoped memory for tpu_custom_call.1']
    #allocation7 [shape = 'u8[12288]{0}', space=vmem, size = 0x3000, scoped, tag = 'output window, operand 0, single buffered']
    %7 = vsyncpa [#allocation3], 0
    %8 = vsyncpa [#allocation6], 0
    %9 = vsyncpa [#allocation4], 0
    // Predicated region
    $region2: #{tpu_custom_call.1} parent=1 // pred_check
      _
    $region3: #{tpu_custom_call.1} parent=1 // pred_check_branch
      %11 = sbr.rel (0) target = $region5
    $region4: #{tpu_custom_call.1} parent=1 // pred_region
      %s12 = sadd.s32 0, 0
      %p13 = scmp.lt.s32.totalorder %s12, 0
      %s14 = scalar_select %p13, %s12, 0
      %s15 = smul.u32 2, %s14
      %s17 = ssub.s32 256, 256
      %18 = vsyncadd [#allocation3], %s17
      %s19 = smul.addr %s15, 128
      %s20 = scalar_lea.hbm %s0, %s19
      %s21 = sshll.u32 [#allocation2], 4
      %s22 = int_to_ptr.vmem [resolvable:$true] %s21
      %27 = dma.hbm_to_vmem [thread:$0]  %s20, 256, %s22, [#allocation3], 128, 128, 8
    $region5: #{tpu_custom_call.1} parent=1 // pred_fallthru
      _
    // Predicated region
    $region6: #{tpu_custom_call.1} parent=1 // pred_check
      _
    $region7: #{tpu_custom_call.1} parent=1 // pred_check_branch
      %29 = sbr.rel (0) target = $region9
    $region8: #{tpu_custom_call.1} parent=1 // pred_region
      %s30 = sadd.s32 0, 0
      %p31 = scmp.lt.s32.totalorder %s30, 0
      %s32 = scalar_select %p31, %s30, 0
      %s33 = smul.u32 2, %s32
      %s35 = ssub.s32 256, 256
      %36 = vsyncadd [#allocation6], %s35
      %s37 = smul.addr %s33, 128
      %s38 = scalar_lea.hbm %s1, %s37
      %s39 = sshll.u32 [#allocation5], 4
      %s40 = int_to_ptr.vmem [resolvable:$true] %s39
      %45 = dma.hbm_to_vmem [thread:$0]  %s38, 256, %s40, [#allocation6], 128, 128, 8
    $region9: #{tpu_custom_call.1} parent=1 // pred_fallthru
      _
    // Predicated region
    $region10: #{tpu_custom_call.1} parent=1 // pred_check
      _
    $region11: #{tpu_custom_call.1} parent=1 // pred_check_branch
      %47 = sbr.rel (0) target = $region13
    $region12: #{tpu_custom_call.1} parent=1 // pred_region
      %48 = dma.done [#allocation3], 256
    $region13: #{tpu_custom_call.1} parent=1 // pred_fallthru
      _
    // Predicated region
    $region14: #{tpu_custom_call.1} parent=1 // pred_check
      _
    $region15: #{tpu_custom_call.1} parent=1 // pred_check_branch
      %50 = sbr.rel (0) target = $region17
    $region16: #{tpu_custom_call.1} parent=1 // pred_region
      %51 = dma.done [#allocation6], 256
    $region17: #{tpu_custom_call.1} parent=1 // pred_fallthru
      _
    %s52 = sadd.s32 0, 0
    %p53 = scmp.lt.s32.totalorder %s52, 0
    %s54 = scalar_select %p53, %s52, 0
    %s55 = smul.u32 2, %s54
    %s56 = sadd.s32 0, 0
    %p57 = scmp.lt.s32.totalorder %s56, 0
    %s58 = scalar_select %p57, %s56, 0
    %s59 = smul.u32 2, %s58
    %p60 = scmp.eq.s32.totalorder 0, 0
    // Predicated region
    $region18: #{tpu_custom_call.1} parent=1 // pred_check
      %p61 = pneg %p60
    $region19: #{tpu_custom_call.1} parent=1 // pred_check_branch
      %63 = sbr.rel (%p61) target = $region21
    $region20: #{tpu_custom_call.1} parent=1 // pred_region
      %64 = vst [vmem:[#allocation7] sm:$0xff] 0.0
      %65 = vst [vmem:[#allocation7 + $0x8] sm:$0xff] 0.0
      %66 = vst [vmem:[#allocation7 + $0x10] sm:$0xff] 0.0
    $region21: #{tpu_custom_call.1} parent=1 // pred_fallthru
      _
    %v67 = vld [vmem:[#allocation2] sm:$0xff]
    %v68 = vld [vmem:[#allocation2 + $0x8] sm:$0xff]
    %v69 = vld [vmem:[#allocation5] sm:$0xff]
    %v70 = vld [vmem:[#allocation5 + $0x8] sm:$0xff]
    %v71 = vand.u32 2147483647, %v67
    %v72 = vand.u32 2147483647, %v68
    %v73 = vsub.f32 0.0, %v71
    %v74 = vsub.f32 0.0, %v72
    %v75 = vmul.f32 %v73, 1.442695
    %v76 = vpow.pop %v75
    %v77 = vmul.f32 %v74, 1.442695
    %v78 = vpow.pop %v77
    %v79 = vadd.f32 %v76, 1.0
    %v80 = vadd.f32 %v78, 1.0
    %v81 = vrcp.pop %v79
    %v82 = vrcp.pop %v80
    %vm83 = vcmp.ge.f32.partialorder %v67, 0.0
    %vm84 = vcmp.ge.f32.partialorder %v68, 0.0
    %v85 = vmul.f32 %v76, %v81
    %v86 = vmul.f32 %v78, %v82
    %v87 = vsel %vm83, %v81, %v85
    %v88 = vsel %vm84, %v82, %v86
    %v89 = vmax.f32 %v67, 0.0
    %v90 = vmax.f32 %v68, 0.0
    %v91 = vmul.f32 %v67, %v69
    %v92 = vmul.f32 %v68, %v70
    %v93 = vsub.f32 %v89, %v91
    %v94 = vsub.f32 %v90, %v92
    %v95 = vadd.f32 %v76, 1.0
    %v96 = vlog2.pop %v95
    %v97 = vmul.f32 %v96, 0.6931472
    %v98 = vmul.f32 -0.5, %v76
    %v99 = vadd.f32 %v98, 1.0
    %v100 = vmul.f32 %v99, %v76
    %v101 = vand.u32 2147483647, %v76
    %vm102 = vcmp.lt.f32.partialorder %v101, 0.0004427343
    %v103 = vsel %vm102, %v100, %v97
    %v104 = vadd.f32 %v78, 1.0
    %v105 = vlog2.pop %v104
    %v106 = vmul.f32 %v105, 0.6931472
    %v107 = vmul.f32 -0.5, %v78
    %v108 = vadd.f32 %v107, 1.0
    %v109 = vmul.f32 %v108, %v78
    %v110 = vand.u32 2147483647, %v78
    %vm111 = vcmp.lt.f32.partialorder %v110, 0.0004427343
    %v112 = vsel %vm111, %v109, %v106
    %v113 = vadd.f32 %v93, %v103
    %v114 = vadd.f32 %v94, %v112
    %v115 = vsub.f32 0.0, %v113
    %v116 = vsub.f32 0.0, %v114
    %v117 = vmul.f32 %v115, 1.442695
    %v118 = vpow.pop %v117
    %v119 = vmul.f32 %v116, 1.442695
    %v120 = vpow.pop %v119
    %v121 = vsub.f32 1.0, %v118
    %v122 = vsub.f32 1.0, %v120
    %v123 = vmul.f32 %v121, %v121
    %v124 = vmul.f32 %v122, %v122
    %v125 = vmul.f32 %v123, 0.25
    %v126 = vmul.f32 %v124, 0.25
    %v127 = vmul.f32 %v125, %v113
    %v128 = vmul.f32 %v126, %v114
    %v129 = vld [vmem:[#allocation7] sm:$0xff]
    %v130 = vmul.f32 %v87, %v69
    %v131 = vmul.f32 %v88, %v70
    %vm132 = vcmask 130048
    %v134 = vsel %vm132, 1.0, 0
    %136 = vmatprep.subr.mxu0 0.0
    %137 = vmatpush1.msra.mxu0 %v130
    %138 = vmatprep.subr.mxu0 0.0
    %139 = vmatpush1.msra.mxu0 %v131
    %140 = vmatprep.subr.mxu0 0.0
    %141 = vmatpush1.msra.mxu0 0.0
    %142 = vmatprep.subr.mxu0 0.0
    %143 = vmatpush1.msra.mxu0 0.0
    %144 = vmatprep.subr.mxu0 0.0
    %145 = vmatpush1.msra.mxu0 0.0
    %146 = vmatprep.subr.mxu0 0.0
    %147 = vmatpush1.msra.mxu0 0.0
    %148 = vmatprep.subr.mxu0 0.0
    %149 = vmatpush1.msra.mxu0 0.0
    %150 = vmatprep.subr.mxu0 0.0
    %151 = vmatpush1.msra.mxu0 0.0
    %152 = vmatprep.subr.mxu0 0.0
    %153 = vmatpush1.msra.mxu0 0.0
    %154 = vmatprep.subr.mxu0 0.0
    %155 = vmatpush1.msra.mxu0 0.0
    %156 = vmatprep.subr.mxu0 0.0
    %157 = vmatpush1.msra.mxu0 0.0
    %158 = vmatprep.subr.mxu0 0.0
    %159 = vmatpush1.msra.mxu0 0.0
    %160 = vmatprep.subr.mxu0 0.0
    %161 = vmatpush1.msra.mxu0 0.0
    %162 = vmatprep.subr.mxu0 0.0
    %163 = vmatpush1.msra.mxu0 0.0
    %164 = vmatprep.subr.mxu0 0.0
    %165 = vmatpush1.msra.mxu0 0.0
    %166 = vmatprep.subr.mxu0 0.0
    %167 = vmatpush1.msra.mxu0 0.0
    %168 = vmatprep.subr.mxu0 0.0
    %169 = vmatpush1.msra.mxu0 0.0
    %170 = vmatprep.subr.mxu0 0.0
    %171 = vmatpush1.msra.mxu0 0.0
    %172 = vmatprep.subr.mxu0 0.0
    %173 = vmatpush1.msra.mxu0 0.0
    %174 = vmatprep.subr.mxu0 0.0
    %175 = vmatpush1.msra.mxu0 0.0
    %176 = vmatprep.subr.mxu0 0.0
    %177 = vmatpush1.msra.mxu0 0.0
    %178 = vmatprep.subr.mxu0 0.0
    %179 = vmatpush1.msra.mxu0 0.0
    %180 = vmatprep.subr.mxu0 0.0
    %181 = vmatpush1.msra.mxu0 0.0
    %182 = vmatprep.subr.mxu0 0.0
    %183 = vmatpush1.msra.mxu0 0.0
    %184 = vmatprep.subr.mxu0 0.0
    %185 = vmatpush1.msra.mxu0 0.0
    %186 = vmatprep.subr.mxu0 0.0
    %187 = vmatpush1.msra.mxu0 0.0
    %188 = vmatprep.subr.mxu0 0.0
    %189 = vmatpush1.msra.mxu0 0.0
    %190 = vmatprep.subr.mxu0 0.0
    %191 = vmatpush1.msra.mxu0 0.0
    %192 = vmatprep.subr.mxu0 0.0
    %193 = vmatpush1.msra.mxu0 0.0
    %194 = vmatprep.subr.mxu0 0.0
    %195 = vmatpush1.msra.mxu0 0.0
    %196 = vmatprep.subr.mxu0 0.0
    %197 = vmatpush1.msra.mxu0 0.0
    %198 = vmatprep.subr.mxu0 0.0
    %199 = vmatpush1.msra.mxu0 0.0
    %200 = vmatprep.mubr.f32.mxu0 0.0
    %201 = vmatmul.mubr.f32.gmra.mrb[0].mxu0 %v134
    %v202 = vpop.f32.mrb[0].mxu0
    %v203 = vadd.f32 0.0, %v202
    %v204 = vpop.f32.mrb[0].mxu0
    %205 = vdwg.mxu0
    %v206 = vadd.f32 %v129, %v203
    %207 = vst [vmem:[#allocation7] sm:$0xff] %v206
    %s208 = scalar_lea.vmem [#allocation7], 8
    %v209 = vld [vmem:[%s208] sm:$0xff]
    %v210 = vadd.f32 %v87, %v69
    %v211 = vadd.f32 %v88, %v70
    %212 = vmatprep.subr.mxu0 0.0
    %213 = vmatpush1.msra.mxu0 %v210
    %214 = vmatprep.subr.mxu0 0.0
    %215 = vmatpush1.msra.mxu0 %v211
    %216 = vmatprep.subr.mxu0 0.0
    %217 = vmatpush1.msra.mxu0 0.0
    %218 = vmatprep.subr.mxu0 0.0
    %219 = vmatpush1.msra.mxu0 0.0
    %220 = vmatprep.subr.mxu0 0.0
    %221 = vmatpush1.msra.mxu0 0.0
    %222 = vmatprep.subr.mxu0 0.0
    %223 = vmatpush1.msra.mxu0 0.0
    %224 = vmatprep.subr.mxu0 0.0
    %225 = vmatpush1.msra.mxu0 0.0
    %226 = vmatprep.subr.mxu0 0.0
    %227 = vmatpush1.msra.mxu0 0.0
    %228 = vmatprep.subr.mxu0 0.0
    %229 = vmatpush1.msra.mxu0 0.0
    %230 = vmatprep.subr.mxu0 0.0
    %231 = vmatpush1.msra.mxu0 0.0
    %232 = vmatprep.subr.mxu0 0.0
    %233 = vmatpush1.msra.mxu0 0.0
    %234 = vmatprep.subr.mxu0 0.0
    %235 = vmatpush1.msra.mxu0 0.0
    %236 = vmatprep.subr.mxu0 0.0
    %237 = vmatpush1.msra.mxu0 0.0
    %238 = vmatprep.subr.mxu0 0.0
    %239 = vmatpush1.msra.mxu0 0.0
    %240 = vmatprep.subr.mxu0 0.0
    %241 = vmatpush1.msra.mxu0 0.0
    %242 = vmatprep.subr.mxu0 0.0
    %243 = vmatpush1.msra.mxu0 0.0
    %244 = vmatprep.subr.mxu0 0.0
    %245 = vmatpush1.msra.mxu0 0.0
    %246 = vmatprep.subr.mxu0 0.0
    %247 = vmatpush1.msra.mxu0 0.0
    %248 = vmatprep.subr.mxu0 0.0
    %249 = vmatpush1.msra.mxu0 0.0
    %250 = vmatprep.subr.mxu0 0.0
    %251 = vmatpush1.msra.mxu0 0.0
    %252 = vmatprep.subr.mxu0 0.0
    %253 = vmatpush1.msra.mxu0 0.0
    %254 = vmatprep.subr.mxu0 0.0
    %255 = vmatpush1.msra.mxu0 0.0
    %256 = vmatprep.subr.mxu0 0.0
    %257 = vmatpush1.msra.mxu0 0.0
    %258 = vmatprep.subr.mxu0 0.0
    %259 = vmatpush1.msra.mxu0 0.0
    %260 = vmatprep.subr.mxu0 0.0
    %261 = vmatpush1.msra.mxu0 0.0
    %262 = vmatprep.subr.mxu0 0.0
    %263 = vmatpush1.msra.mxu0 0.0
    %264 = vmatprep.subr.mxu0 0.0
    %265 = vmatpush1.msra.mxu0 0.0
    %266 = vmatprep.subr.mxu0 0.0
    %267 = vmatpush1.msra.mxu0 0.0
    %268 = vmatprep.subr.mxu0 0.0
    %269 = vmatpush1.msra.mxu0 0.0
    %270 = vmatprep.subr.mxu0 0.0
    %271 = vmatpush1.msra.mxu0 0.0
    %272 = vmatprep.subr.mxu0 0.0
    %273 = vmatpush1.msra.mxu0 0.0
    %274 = vmatprep.subr.mxu0 0.0
    %275 = vmatpush1.msra.mxu0 0.0
    %276 = vmatprep.mubr.f32.mxu0 0.0
    %277 = vmatmul.mubr.f32.gmra.mrb[0].mxu0 %v134
    %v278 = vpop.f32.mrb[0].mxu0
    %v279 = vadd.f32 0.0, %v278
    %v280 = vpop.f32.mrb[0].mxu0
    %281 = vdwg.mxu0
    %v282 = vadd.f32 %v209, %v279
    %283 = vst [vmem:[%s208] sm:$0xff] %v282
    %s284 = scalar_lea.vmem [#allocation7], 16
    %v285 = vld [vmem:[%s284] sm:$0xff]
    %286 = vmatprep.subr.mxu0 0.0
    %287 = vmatpush1.msra.mxu0 %v127
    %288 = vmatprep.subr.mxu0 0.0
    %289 = vmatpush1.msra.mxu0 %v128
    %290 = vmatprep.subr.mxu0 0.0
    %291 = vmatpush1.msra.mxu0 0.0
    %292 = vmatprep.subr.mxu0 0.0
    %293 = vmatpush1.msra.mxu0 0.0
    %294 = vmatprep.subr.mxu0 0.0
    %295 = vmatpush1.msra.mxu0 0.0
    %296 = vmatprep.subr.mxu0 0.0
    %297 = vmatpush1.msra.mxu0 0.0
    %298 = vmatprep.subr.mxu0 0.0
    %299 = vmatpush1.msra.mxu0 0.0
    %300 = vmatprep.subr.mxu0 0.0
    %301 = vmatpush1.msra.mxu0 0.0
    %302 = vmatprep.subr.mxu0 0.0
    %303 = vmatpush1.msra.mxu0 0.0
    %304 = vmatprep.subr.mxu0 0.0
    %305 = vmatpush1.msra.mxu0 0.0
    %306 = vmatprep.subr.mxu0 0.0
    %307 = vmatpush1.msra.mxu0 0.0
    %308 = vmatprep.subr.mxu0 0.0
    %309 = vmatpush1.msra.mxu0 0.0
    %310 = vmatprep.subr.mxu0 0.0
    %311 = vmatpush1.msra.mxu0 0.0
    %312 = vmatprep.subr.mxu0 0.0
    %313 = vmatpush1.msra.mxu0 0.0
    %314 = vmatprep.subr.mxu0 0.0
    %315 = vmatpush1.msra.mxu0 0.0
    %316 = vmatprep.subr.mxu0 0.0
    %317 = vmatpush1.msra.mxu0 0.0
    %318 = vmatprep.subr.mxu0 0.0
    %319 = vmatpush1.msra.mxu0 0.0
    %320 = vmatprep.subr.mxu0 0.0
    %321 = vmatpush1.msra.mxu0 0.0
    %322 = vmatprep.subr.mxu0 0.0
    %323 = vmatpush1.msra.mxu0 0.0
    %324 = vmatprep.subr.mxu0 0.0
    %325 = vmatpush1.msra.mxu0 0.0
    %326 = vmatprep.subr.mxu0 0.0
    %327 = vmatpush1.msra.mxu0 0.0
    %328 = vmatprep.subr.mxu0 0.0
    %329 = vmatpush1.msra.mxu0 0.0
    %330 = vmatprep.subr.mxu0 0.0
    %331 = vmatpush1.msra.mxu0 0.0
    %332 = vmatprep.subr.mxu0 0.0
    %333 = vmatpush1.msra.mxu0 0.0
    %334 = vmatprep.subr.mxu0 0.0
    %335 = vmatpush1.msra.mxu0 0.0
    %336 = vmatprep.subr.mxu0 0.0
    %337 = vmatpush1.msra.mxu0 0.0
    %338 = vmatprep.subr.mxu0 0.0
    %339 = vmatpush1.msra.mxu0 0.0
    %340 = vmatprep.subr.mxu0 0.0
    %341 = vmatpush1.msra.mxu0 0.0
    %342 = vmatprep.subr.mxu0 0.0
    %343 = vmatpush1.msra.mxu0 0.0
    %344 = vmatprep.subr.mxu0 0.0
    %345 = vmatpush1.msra.mxu0 0.0
    %346 = vmatprep.subr.mxu0 0.0
    %347 = vmatpush1.msra.mxu0 0.0
    %348 = vmatprep.subr.mxu0 0.0
    %349 = vmatpush1.msra.mxu0 0.0
    %350 = vmatprep.mubr.f32.mxu0 0.0
    %351 = vmatmul.mubr.f32.gmra.mrb[0].mxu0 %v134
    %v352 = vpop.f32.mrb[0].mxu0
    %v353 = vadd.f32 0.0, %v352
    %v354 = vpop.f32.mrb[0].mxu0
    %355 = vdwg.mxu0
    %v356 = vadd.f32 %v285, %v353
    %357 = vst [vmem:[%s284] sm:$0xff] %v356
    // Predicated region
    $region22: #{tpu_custom_call.1} parent=1 // pred_check
      _
    $region23: #{tpu_custom_call.1} parent=1 // pred_check_branch
      %359 = sbr.rel (0) target = $region25
    $region24: #{tpu_custom_call.1} parent=1 // pred_region
      %s361 = ssub.s32 384, 384
      %362 = vsyncadd [#allocation4], %s361
      %s363 = sshll.u32 [#allocation7], 4
      %s364 = int_to_ptr.vmem [resolvable:$true] %s363
      %369 = dma.vmem_to_hbm [thread:$0]  %s364, 384, %s2, [#allocation4], 128, 128, 8
    $region25: #{tpu_custom_call.1} parent=1 // pred_fallthru
      _
    // Predicated region
    $region26: #{tpu_custom_call.1} parent=1 // pred_check
      _
    $region27: #{tpu_custom_call.1} parent=1 // pred_check_branch
      %371 = sbr.rel (0) target = $region29
    $region28: #{tpu_custom_call.1} parent=1 // pred_region
      %372 = dma.done [#allocation4], 384
    $region29: #{tpu_custom_call.1} parent=1 // pred_fallthru
      _
    %373 = vsyncpa [#allocation3], 1
    %374 = vsyncpa [#allocation6], 1
    %375 = vsyncpa [#allocation4], 1

</llo_original>
